<compile_context>
chip_gen: v5e
topology: v5e:2x2
jax: 0.10.0
libtpu: 0.0.40
codegen_flags: <defaults>
</compile_context>

<pallas_src>
import functools

import jax
import jax.numpy as jnp
from jax.experimental import pallas as pl
from jax.experimental.pallas import tpu as pltpu


def _branch_kernel(x_ref, w1_ref, b1_ref, w2_ref, b2_ref, w3_ref, b3_ref,
                   o_ref, acc_ref, *, inv_s, s_total, tile_s, n_s_steps):
    s = pl.program_id(1)

    @pl.when(s == 0)
    def _():
        acc_ref[...] = jnp.zeros_like(acc_ref)

    if tile_s % 128 == 0:
        lane_chunks = tile_s // 128
        group = 4  # chunks summed in registers between accumulator read-modify-writes

        def accumulate(base):
            # base: static element offset of this tile's first lane within S when it is
            #       the (possibly partial) tail tile; None for tiles known to be full.
            if base is None:
                live = list(range(lane_chunks))
            else:
                live = [g for g in range(lane_chunks) if base + g * 128 < s_total]
            for i in range(0, len(live), group):
                t = None
                for g in live[i:i + group]:
                    c = x_ref[:, :, pl.ds(g * 128, 128)].astype(jnp.float32)
                    if base is not None and base + g * 128 + 128 > s_total:
                        # Partial chunk straddling S: zero the out-of-bounds lanes
                        # (their contents are unspecified). Mask is compile-time const.
                        lane = jax.lax.broadcasted_iota(jnp.int32, (1, 1, 128), 2)
                        c = jnp.where(base + g * 128 + lane < s_total, c, 0.0)
                    t = c if t is None else t + c
                acc_ref[...] += t

        rem = s_total % tile_s
        if rem == 0:
            accumulate(None)
        elif n_s_steps == 1:
            accumulate(0)
        else:
            last = n_s_steps - 1

            @pl.when(s < last)
            def _():
                accumulate(None)

            @pl.when(s == last)
            def _():
                accumulate(last * tile_s)
    else:
        # S < 128: a single full-extent tile; one (cheap, once-only) lane reduce.
        acc_ref[...] += jnp.sum(x_ref[...].astype(jnp.float32), axis=-1, keepdims=True)

    @pl.when(s == n_s_steps - 1)
    def _():
        # AdaptiveAvgPool3d((1,1,1)) + flatten == mean over all spatial positions.
        pooled = jnp.sum(acc_ref[...], axis=-1) * inv_s          # (n_blk, C): one XLU reduce

        # Linear(C, 128) + ReLU
        h = jnp.dot(pooled, w1_ref[...],
                    preferred_element_type=jnp.float32) + b1_ref[...]
        h = jnp.maximum(h, 0.0)

        # Linear(128, 32) + ReLU
        h = jnp.dot(h, w2_ref[...],
                    preferred_element_type=jnp.float32) + b2_ref[...]
        h = jnp.maximum(h, 0.0)

        # Linear(32, num_classes)
        o = jnp.dot(h, w3_ref[...],
                    preferred_element_type=jnp.float32) + b3_ref[...]
        o_ref[...] = o.astype(o_ref.dtype)


def _vmem_budgets():
    """(compiler vmem limit, double-buffered input-tile budget), generation-aware."""
    try:
        cap = int(pltpu.get_tpu_info().vmem_capacity_bytes)
    except Exception:
        cap = 64 << 20                       # conservative fallback: v7x-sized part
    if cap >= (96 << 20):                    # v5e / v6e: 128 MiB physical VMEM
        return 64 << 20, 32 << 20
    return 28 << 20, 14 << 20                # v7x: 64 MiB physical VMEM


def classification_branch_3d(x, params, *, tile_s_max=4096):
    """x: (N, C, D, H, W).  params: dict of weights/biases (see _init_params)."""
    N, C, D, H, W = x.shape
    S = D * H * W
    x3 = x.reshape(N, C, S)                  # S stays the contiguous lane axis
    # NOTE: if C % 8 != 0 a flattened (N*C, S) layout would avoid sublane padding; the
    # usual ResNet channel counts are multiples of 8 so the 3-D layout DMAs densely.

    w1, b1 = params["w1"], params["b1"]      # (C,128), (1,128)
    w2, b2 = params["w2"], params["b2"]      # (128,32), (1,32)
    w3, b3 = params["w3"], params["b3"]      # (32,K),  (1,K)
    num_classes = w3.shape[1]

    # --- batch blocking --------------------------------------------------------------
    # The output block is (n_blk, num_classes), so n_blk must be a multiple of 8 or equal
    # to N.  Prefer the largest multiple-of-8 block that still leaves >= 2 batch blocks
    # (keeps both v7x TensorCores busy via the "parallel" batch axis).
    if N % 8 == 0:
        n_blk = 8
        for cand in (64, 32, 16, 8):
            if N % cand == 0 and N // cand >= 2:
                n_blk = cand
                break
    else:
        n_blk = N
    num_n_blocks = N // n_blk

    # --- spatial tiling ----------------------------------------------------------------
    vmem_limit, input_budget = _vmem_budgets()
    per_lane_bytes = n_blk * C * x3.dtype.itemsize
    if S >= 128:
        t_budget = (input_budget // (2 * per_lane_bytes)) // 128 * 128
        t_max = max(128, (tile_s_max // 128) * 128)
        tile_s = max(128, min(t_max, t_budget, (S // 128) * 128))
    else:
        tile_s = S                            # single full-extent block
    num_s_steps = pl.cdiv(S, tile_s)          # partial tail tile is masked in-kernel
    acc_lanes = 128 if tile_s % 128 == 0 else 1

    def const_spec(arr):
        # Constant block index -> DMA'd once, stays VMEM-resident across the grid.
        return pl.BlockSpec(arr.shape, lambda n, s: (0, 0))

    grid_spec = pltpu.PrefetchScalarGridSpec(
        num_scalar_prefetch=0,
        grid=(num_n_blocks, num_s_steps),
        in_specs=[
            pl.BlockSpec((n_blk, C, tile_s), lambda n, s: (n, 0, s)),
            const_spec(w1), const_spec(b1),
            const_spec(w2), const_spec(b2),
            const_spec(w3), const_spec(b3),
        ],
        out_specs=pl.BlockSpec((n_blk, num_classes), lambda n, s: (n, 0)),
        scratch_shapes=[pltpu.VMEM((n_blk, C, acc_lanes), jnp.float32)],
    )

    flops = N * C * S + 2 * N * (C * 128 + 128 * 32 + 32 * num_classes)
    bytes_accessed = (N * C * S * x3.dtype.itemsize
                      + sum(int(a.size) * a.dtype.itemsize
                            for a in (w1, b1, w2, b2, w3, b3))
                      + N * num_classes * 4)

    kernel = functools.partial(_branch_kernel, inv_s=1.0 / float(S), s_total=S,
                               tile_s=tile_s, n_s_steps=num_s_steps)
    return pl.pallas_call(
        kernel,
        out_shape=jax.ShapeDtypeStruct((N, num_classes), jnp.float32),
        grid_spec=grid_spec,
        compiler_params=pltpu.CompilerParams(
            dimension_semantics=("parallel", "arbitrary"),
            vmem_limit_bytes=vmem_limit,
        ),
        cost_estimate=pl.CostEstimate(
            flops=flops, transcendentals=0, bytes_accessed=bytes_accessed),
    )(x3, w1, b1, w2, b2, w3, b3)


def _init_params(key, input_channels, num_classes):
    k1, k2, k3, k4, k5, k6 = jax.random.split(key, 6)

    def lin(kw, kb, fan_in, fan_out):
        bound = 1.0 / (fan_in ** 0.5)
        w = jax.random.uniform(kw, (fan_in, fan_out), jnp.float32, -bound, bound)
        b = jax.random.uniform(kb, (1, fan_out), jnp.float32, -bound, bound)
        return w, b

    w1, b1 = lin(k1, k2, input_channels, 128)
    w2, b2 = lin(k3, k4, 128, 32)
    w3, b3 = lin(k5, k6, 32, num_classes)
    return {"w1": w1, "b1": b1, "w2": w2, "b2": b2, "w3": w3, "b3": b3}


def _reference(x, params):
    N = x.shape[0]
    pooled = jnp.mean(x.reshape(N, x.shape[1], -1), axis=-1)
    h = jnp.maximum(pooled @ params["w1"] + params["b1"], 0.0)
    h = jnp.maximum(h @ params["w2"] + params["b2"], 0.0)
    return h @ params["w3"] + params["b3"]


if __name__ == "__main__":
    key = jax.random.PRNGKey(0)
    k1, k2, k3, k4 = jax.random.split(key, 4)

    # Case 1: (N, C, D, H, W) = (2, 32, 6, 10, 10), S = 600, forced tile_s = 256.
    # Exercises multi-step accumulation and the masked partial tail tile (no HBM pad copy).
    N, C, D, H, W = 2, 32, 6, 10, 10
    num_classes = 5
    x = jax.random.normal(k1, (N, C, D, H, W), jnp.float32)
    params = _init_params(k2, C, num_classes)
    out = classification_branch_3d(x, params, tile_s_max=256)
    jax.block_until_ready(out)
    ref = _reference(x, params)
    assert out.shape == (N, num_classes)
    assert jnp.allclose(out, ref, atol=1e-3, rtol=1e-3), "case 1 mismatch"

    # Case 2: batch 8, S = 4*8*8 = 256 with default tiling -> full-tile (no-mask) path.
    N2, C2, K2 = 8, 16, 3
    x2 = jax.random.normal(k3, (N2, C2, 4, 8, 8), jnp.float32)
    params2 = _init_params(k4, C2, K2)
    out2 = classification_branch_3d(x2, params2)
    jax.block_until_ready(out2)
    ref2 = _reference(x2, params2)
    assert out2.shape == (N2, K2)
    assert jnp.allclose(out2, ref2, atol=1e-3, rtol=1e-3), "case 2 mismatch"

    print("KERNEL_OK")
</pallas_src>

<mosaic_0001>
module attributes {stable_mosaic.version = 11 : i64} {
  func.func @_branch_kernel(%arg0: i32, %arg1: i32, %arg2: memref<2x32x256xf32, #tpu.memory_space<vmem>>, %arg3: memref<32x128xf32, #tpu.memory_space<vmem>>, %arg4: memref<1x128xf32, #tpu.memory_space<vmem>>, %arg5: memref<128x32xf32, #tpu.memory_space<vmem>>, %arg6: memref<1x32xf32, #tpu.memory_space<vmem>>, %arg7: memref<32x5xf32, #tpu.memory_space<vmem>>, %arg8: memref<1x5xf32, #tpu.memory_space<vmem>>, %arg9: memref<2x5xf32, #tpu.memory_space<vmem>>, %arg10: memref<2x32x128xf32, #tpu.memory_space<vmem>>) attributes {dimension_semantics = [#tpu.dimension_semantics<parallel>, #tpu.dimension_semantics<arbitrary>], iteration_bounds = array<i64: 1, 3>, scalar_prefetch = 0 : i64, scratch_operands = 1 : i64, tpu.core_type = #tpu.core_type<tc>, window_params = [{transform_indices = @transform_0, window_bounds = array<i64: 2, 32, 256>}, {pipeline_mode = #tpu.pipeline_mode<synchronous>, transform_indices = @transform_1, window_bounds = array<i64: 32, 128>}, {pipeline_mode = #tpu.pipeline_mode<synchronous>, transform_indices = @transform_2, window_bounds = array<i64: 1, 128>}, {pipeline_mode = #tpu.pipeline_mode<synchronous>, transform_indices = @transform_3, window_bounds = array<i64: 128, 32>}, {pipeline_mode = #tpu.pipeline_mode<synchronous>, transform_indices = @transform_4, window_bounds = array<i64: 1, 32>}, {pipeline_mode = #tpu.pipeline_mode<synchronous>, transform_indices = @transform_5, window_bounds = array<i64: 32, 5>}, {pipeline_mode = #tpu.pipeline_mode<synchronous>, transform_indices = @transform_6, window_bounds = array<i64: 1, 5>}, {transform_indices = @transform_7, window_bounds = array<i64: 2, 5>}]} {
    %c0_i32 = arith.constant 0 : i32
    %0 = arith.cmpi eq, %arg1, %c0_i32 : i32
    %1 = arith.extui %0 : i1 to i32
    %c0_i32_0 = arith.constant 0 : i32
    %2 = arith.cmpi ne, %1, %c0_i32_0 : i32
    scf.if %2 {
      %cst = arith.constant 0.000000e+00 : f32
      %12 = vector.broadcast %cst : f32 to vector<2x32x128xf32>
      %c0 = arith.constant 0 : index
      %c0_6 = arith.constant 0 : index
      %c0_7 = arith.constant 0 : index
      %13 = vector.load %arg10[%c0, %c0_6, %c0_7] : memref<2x32x128xf32, #tpu.memory_space<vmem>>, vector<2x32x128xf32>
      tpu.vector_store %arg10[%c0, %c0_6, %c0_7], %12 {strides = array<i32>} : memref<2x32x128xf32, #tpu.memory_space<vmem>>, vector<2x32x128xf32>,
    } else {
    }
    %c2_i32 = arith.constant 2 : i32
    %3 = arith.cmpi slt, %arg1, %c2_i32 : i32
    %4 = arith.extui %3 : i1 to i32
    %c0_i32_1 = arith.constant 0 : i32
    %5 = arith.cmpi ne, %4, %c0_i32_1 : i32
    scf.if %5 {
      %c0 = arith.constant 0 : index
      %c0_6 = arith.constant 0 : index
      %c0_7 = arith.constant 0 : index
      %12 = vector.load %arg2[%c0, %c0_6, %c0_7] : memref<2x32x256xf32, #tpu.memory_space<vmem>>, vector<2x32x128xf32>
      %c0_8 = arith.constant 0 : index
      %c0_9 = arith.constant 0 : index
      %c128 = arith.constant 128 : index
      %13 = vector.load %arg2[%c0_8, %c0_9, %c128] : memref<2x32x256xf32, #tpu.memory_space<vmem>>, vector<2x32x128xf32>
      %14 = arith.addf %12, %13 : vector<2x32x128xf32>
      %c0_10 = arith.constant 0 : index
      %c0_11 = arith.constant 0 : index
      %c0_12 = arith.constant 0 : index
      %15 = vector.load %arg10[%c0_10, %c0_11, %c0_12] : memref<2x32x128xf32, #tpu.memory_space<vmem>>, vector<2x32x128xf32>
      %16 = arith.addf %15, %14 : vector<2x32x128xf32>
      %c0_13 = arith.constant 0 : index
      %c0_14 = arith.constant 0 : index
      %c0_15 = arith.constant 0 : index
      %17 = vector.load %arg10[%c0_13, %c0_14, %c0_15] : memref<2x32x128xf32, #tpu.memory_space<vmem>>, vector<2x32x128xf32>
      tpu.vector_store %arg10[%c0_13, %c0_14, %c0_15], %16 {strides = array<i32>} : memref<2x32x128xf32, #tpu.memory_space<vmem>>, vector<2x32x128xf32>,
    } else {
    }
    %c2_i32_2 = arith.constant 2 : i32
    %6 = arith.cmpi eq, %arg1, %c2_i32_2 : i32
    %7 = arith.extui %6 : i1 to i32
    %c0_i32_3 = arith.constant 0 : i32
    %8 = arith.cmpi ne, %7, %c0_i32_3 : i32
    scf.if %8 {
      %c0 = arith.constant 0 : index
      %c0_6 = arith.constant 0 : index
      %c0_7 = arith.constant 0 : index
      %12 = vector.load %arg2[%c0, %c0_6, %c0_7] : memref<2x32x256xf32, #tpu.memory_space<vmem>>, vector<2x32x128xf32>
      %13 = tpu.iota {dimensions = array<i32: 2>} : vector<1x1x128xi32>
      %c512_i32 = arith.constant 512 : i32
      %14 = vector.broadcast %c512_i32 : i32 to vector<1x1x128xi32>
      %15 = arith.addi %14, %13 : vector<1x1x128xi32>
      %c600_i32 = arith.constant 600 : i32
      %16 = vector.broadcast %c600_i32 : i32 to vector<1x1x128xi32>
      %17 = arith.cmpi slt, %15, %16 : vector<1x1x128xi32>
      %cst = arith.constant 0.000000e+00 : f32
      %18 = vector.shape_cast %17 : vector<1x1x128xi1> to vector<1x1x128xi1>
      %19 = vector.broadcast %18 : vector<1x1x128xi1> to vector<2x32x128xi1>
      %20 = vector.broadcast %cst : f32 to vector<2x32x128xf32>
      %21 = arith.select %19, %12, %20 : vector<2x32x128xi1>, vector<2x32x128xf32>
      %c0_8 = arith.constant 0 : index
      %c0_9 = arith.constant 0 : index
      %c0_10 = arith.constant 0 : index
      %22 = vector.load %arg10[%c0_8, %c0_9, %c0_10] : memref<2x32x128xf32, #tpu.memory_space<vmem>>, vector<2x32x128xf32>
      %23 = arith.addf %22, %21 : vector<2x32x128xf32>
      %c0_11 = arith.constant 0 : index
      %c0_12 = arith.constant 0 : index
      %c0_13 = arith.constant 0 : index
      %24 = vector.load %arg10[%c0_11, %c0_12, %c0_13] : memref<2x32x128xf32, #tpu.memory_space<vmem>>, vector<2x32x128xf32>
      tpu.vector_store %arg10[%c0_11, %c0_12, %c0_13], %23 {strides = array<i32>} : memref<2x32x128xf32, #tpu.memory_space<vmem>>, vector<2x32x128xf32>,
    } else {
    }
    %c2_i32_4 = arith.constant 2 : i32
    %9 = arith.cmpi eq, %arg1, %c2_i32_4 : i32
    %10 = arith.extui %9 : i1 to i32
    %c0_i32_5 = arith.constant 0 : i32
    %11 = arith.cmpi ne, %10, %c0_i32_5 : i32
    scf.if %11 {
      %c0 = arith.constant 0 : index
      %c0_6 = arith.constant 0 : index
      %c0_7 = arith.constant 0 : index
      %12 = vector.load %arg10[%c0, %c0_6, %c0_7] : memref<2x32x128xf32, #tpu.memory_space<vmem>>, vector<2x32x128xf32>
      %cst = arith.constant dense<0.000000e+00> : vector<2x32xf32>
      %13 = vector.multi_reduction <add>, %12, %cst [2] : vector<2x32x128xf32> to vector<2x32xf32>
      %cst_8 = arith.constant 0.00166666671 : f32
      %14 = vector.broadcast %cst_8 : f32 to vector<2x32xf32>
      %15 = arith.mulf %13, %14 : vector<2x32xf32>
      %c0_9 = arith.constant 0 : index
      %c0_10 = arith.constant 0 : index
      %16 = vector.load %arg3[%c0_9, %c0_10] : memref<32x128xf32, #tpu.memory_space<vmem>>, vector<32x128xf32>
      %cst_11 = arith.constant dense<0.000000e+00> : vector<2x128xf32>
      %17 = tpu.matmul %15, %16, %cst_11 {dimension_numbers = #tpu.dot_dimension_numbers<[1], [0], [0], [1], [0, 0, 1, 1], [], []>} : vector<2x32xf32>, vector<32x128xf32>, vector<2x128xf32> -> vector<2x128xf32>
      %c0_12 = arith.constant 0 : index
      %c0_13 = arith.constant 0 : index
      %18 = vector.load %arg4[%c0_12, %c0_13] : memref<1x128xf32, #tpu.memory_space<vmem>>, vector<1x128xf32>
      %19 = vector.broadcast %18 : vector<1x128xf32> to vector<2x128xf32>
      %20 = arith.addf %17, %19 : vector<2x128xf32>
      %cst_14 = arith.constant 0.000000e+00 : f32
      %21 = vector.broadcast %cst_14 : f32 to vector<2x128xf32>
      %22 = arith.maximumf %20, %21 : vector<2x128xf32>
      %c0_15 = arith.constant 0 : index
      %c0_16 = arith.constant 0 : index
      %23 = vector.load %arg5[%c0_15, %c0_16] : memref<128x32xf32, #tpu.memory_space<vmem>>, vector<128x32xf32>
      %cst_17 = arith.constant dense<0.000000e+00> : vector<2x32xf32>
      %24 = tpu.matmul %22, %23, %cst_17 {dimension_numbers = #tpu.dot_dimension_numbers<[1], [0], [0], [1], [0, 0, 1, 1], [], []>} : vector<2x128xf32>, vector<128x32xf32>, vector<2x32xf32> -> vector<2x32xf32>
      %c0_18 = arith.constant 0 : index
      %c0_19 = arith.constant 0 : index
      %25 = vector.load %arg6[%c0_18, %c0_19] : memref<1x32xf32, #tpu.memory_space<vmem>>, vector<1x32xf32>
      %26 = vector.broadcast %25 : vector<1x32xf32> to vector<2x32xf32>
      %27 = arith.addf %24, %26 : vector<2x32xf32>
      %cst_20 = arith.constant 0.000000e+00 : f32
      %28 = vector.broadcast %cst_20 : f32 to vector<2x32xf32>
      %29 = arith.maximumf %27, %28 : vector<2x32xf32>
      %c0_21 = arith.constant 0 : index
      %c0_22 = arith.constant 0 : index
      %30 = vector.load %arg7[%c0_21, %c0_22] : memref<32x5xf32, #tpu.memory_space<vmem>>, vector<32x5xf32>
      %cst_23 = arith.constant dense<0.000000e+00> : vector<2x5xf32>
      %31 = tpu.matmul %29, %30, %cst_23 {dimension_numbers = #tpu.dot_dimension_numbers<[1], [0], [0], [1], [0, 0, 1, 1], [], []>} : vector<2x32xf32>, vector<32x5xf32>, vector<2x5xf32> -> vector<2x5xf32>
      %c0_24 = arith.constant 0 : index
      %c0_25 = arith.constant 0 : index
      %32 = vector.load %arg8[%c0_24, %c0_25] : memref<1x5xf32, #tpu.memory_space<vmem>>, vector<1x5xf32>
      %33 = vector.broadcast %32 : vector<1x5xf32> to vector<2x5xf32>
      %34 = arith.addf %31, %33 : vector<2x5xf32>
      %c0_26 = arith.constant 0 : index
      %c0_27 = arith.constant 0 : index
      %35 = vector.load %arg9[%c0_26, %c0_27] : memref<2x5xf32, #tpu.memory_space<vmem>>, vector<2x5xf32>
      tpu.vector_store %arg9[%c0_26, %c0_27], %34 {strides = array<i32>} : memref<2x5xf32, #tpu.memory_space<vmem>>, vector<2x5xf32>,
    } else {
    }
    return
  }
  func.func @transform_0(%arg0: i32, %arg1: i32) -> (i32, i32, i32) {
    %c0_i32 = arith.constant 0 : i32
    %c0_i32_0 = arith.constant 0 : i32
    return %arg0, %c0_i32, %arg1 : i32, i32, i32
  }
  func.func @transform_1(%arg0: i32, %arg1: i32) -> (i32, i32) {
    %c0_i32 = arith.constant 0 : i32
    %c0_i32_0 = arith.constant 0 : i32
    %c0_i32_1 = arith.constant 0 : i32
    return %c0_i32, %c0_i32_0 : i32, i32
  }
  func.func @transform_2(%arg0: i32, %arg1: i32) -> (i32, i32) {
    %c0_i32 = arith.constant 0 : i32
    %c0_i32_0 = arith.constant 0 : i32
    %c0_i32_1 = arith.constant 0 : i32
    return %c0_i32, %c0_i32_0 : i32, i32
  }
  func.func @transform_3(%arg0: i32, %arg1: i32) -> (i32, i32) {
    %c0_i32 = arith.constant 0 : i32
    %c0_i32_0 = arith.constant 0 : i32
    %c0_i32_1 = arith.constant 0 : i32
    return %c0_i32, %c0_i32_0 : i32, i32
  }
  func.func @transform_4(%arg0: i32, %arg1: i32) -> (i32, i32) {
    %c0_i32 = arith.constant 0 : i32
    %c0_i32_0 = arith.constant 0 : i32
    %c0_i32_1 = arith.constant 0 : i32
    return %c0_i32, %c0_i32_0 : i32, i32
  }
  func.func @transform_5(%arg0: i32, %arg1: i32) -> (i32, i32) {
    %c0_i32 = arith.constant 0 : i32
    %c0_i32_0 = arith.constant 0 : i32
    %c0_i32_1 = arith.constant 0 : i32
    return %c0_i32, %c0_i32_0 : i32, i32
  }
  func.func @transform_6(%arg0: i32, %arg1: i32) -> (i32, i32) {
    %c0_i32 = arith.constant 0 : i32
    %c0_i32_0 = arith.constant 0 : i32
    %c0_i32_1 = arith.constant 0 : i32
    return %c0_i32, %c0_i32_0 : i32, i32
  }
  func.func @transform_7(%arg0: i32, %arg1: i32) -> (i32, i32) {
    %c0_i32 = arith.constant 0 : i32
    %c0_i32_0 = arith.constant 0 : i32
    return %arg0, %c0_i32 : i32, i32
  }
}

</mosaic_0001>

<llo_original>
// kernel: tpu_custom_call.1
$region0: #{tpu_custom_call.1}
  #allocation0 [shape = 'u32[]', space=smem, size = 0x4, offset = 0x4, fixed_abs, tag = 'smem constant byte address 0x4 - core index']
  #allocation1 [shape = 'u32[72,128]{1,0:T(1,128)}', space=vmem, size = 0x9000, scoped, tag = 'internal scratch']
  #allocation2 [shape = 'f32[2,32,128]{2,1,0:T(8,128)}', space=vmem, size = 0x8000, scoped, tag = 'scratch operand']
  %s0 = inlined_call_operand.hbm [shape: f32[2,32,600], index: 0, kind: input, shape index: {}]
  %s1 = inlined_call_operand.vmem [shape: f32[32,128], index: 1, kind: input, shape index: {}]
  %s2 = inlined_call_operand.vmem [shape: f32[1,128], index: 2, kind: input, shape index: {}]
  %s3 = inlined_call_operand.vmem [shape: f32[128,32], index: 3, kind: input, shape index: {}]
  %s4 = inlined_call_operand.vmem [shape: f32[1,32], index: 4, kind: input, shape index: {}]
  %s5 = inlined_call_operand.vmem [shape: f32[32,5], index: 5, kind: input, shape index: {}]
  %s6 = inlined_call_operand.vmem [shape: f32[1,5], index: 6, kind: input, shape index: {}]
  %s7 = inlined_call_operand.hbm [shape: f32[2,5], index: 7, kind: output, shape index: {}]
  %s8 = sld [smem:[#allocation0]]
  $region77: #{tpu_custom_call.1} parent=0
    _
  %s10 = ssub.s32 1, %s8
  %s11 = scalar_select 0, %s10, %s8
  $region1: #{tpu_custom_call.1} parent=0
    #allocation3 [shape = 'u8[131072]{0}', space=vmem, size = 0x20000, scoped, tag = 'input window, operand 0']
    #allocation4 [shape = 's32[2]{0}', space=sflag, size = 0x8, scoped, tag = 'scoped memory for tpu_custom_call.1']
    #allocation5 [shape = 's32[2]{0}', space=sflag, size = 0x8, scoped, tag = 'scoped memory for tpu_custom_call.1']
    #allocation6 [shape = 'u8[1024]{0}', space=vmem, size = 0x400, scoped, tag = 'output window, operand 0, single buffered']
    %12 = vsyncpa [#allocation4], 0
    %s13 = scalar_lea.sflag [#allocation4], 1
    %14 = vsyncpa %s13, 0
    %15 = vsyncpa [#allocation5], 0
    loop: start=0, step=1, limit=5
    $region2: #{tpu_custom_call.1} parent=1 // loop_pre_header
      _
    $region3: #{tpu_custom_call.1} parent=1 // loop_header
      %s17 = sphi 0, %s21
      %p18 = scmp.ge.s32.totalorder %s17, 5
      %s24 = sphi 0, %s36
      %s25 = sphi 0, %s32
      %s26 = sphi 0, %s24
      %s27 = sphi 0, %s25
      %s28 = sphi 0, %s26
      %s29 = sphi 0, %s27
      %s41 = sphi 0, %s43
      %s44 = sphi 0, %s41
      %s45 = sphi 0, %s44
      %s61 = sphi 0, %s45
      %s65 = sphi 0, %s65
      %s67 = sphi 0, %s65
      %s68 = sphi 0, %s67
      %s82 = sphi 0, %s68
      %s86 = sphi 0, %s86
      %s88 = sphi 0, %s86
      %s89 = sphi 0, %s88
      %s103 = sphi 0, %s89
      %s107 = sphi 0, %s107
      %s109 = sphi 0, %s107
      %s110 = sphi 0, %s109
      %s124 = sphi 0, %s110
      %s128 = sphi 0, %s128
      %s130 = sphi 0, %s128
      %s131 = sphi 0, %s130
      %s145 = sphi 0, %s131
      %s149 = sphi 0, %s149
      %s151 = sphi 0, %s149
      %s152 = sphi 0, %s151
      %s166 = sphi 0, %s152
      %s170 = sphi 0, %s170
      %s172 = sphi 0, %s170
      %s173 = sphi 0, %s172
      %s187 = sphi 0, %s173
      %s193 = sphi 0, %s195
      %s196 = sphi 0, %s193
      %s197 = sphi 0, %s196
      %s213 = sphi 0, %s197
    $region4: #{tpu_custom_call.1} parent=1 // loop_header_branch
      %20 = sbr.rel (%p18) target = $region8
    $region5: #{tpu_custom_call.1} parent=1 // loop_body
      %s22 = ssub.s32 %s17, 1
      %s23 = ssub.s32 %s17, 2
      %s30 = sadd.s32 1, %s25
      %p31 = scmp.ge.s32.totalorder %s30, 3
      %s32 = scalar_select %p31, 0, %s30
      %s33 = sadd.s32 1, %s24
      %s34 = scalar_select %p31, %s33, %s24
      %p35 = scmp.ge.s32.totalorder %s34, 1
      %s36 = scalar_select %p35, 0, %s34
      %s37 = ssub.s32 %s24, %s36
      %s38 = ssub.s32 %s25, %s32
      %s39 = sor.u32 %s37, %s38
      %p40 = scmp.eq.s32.totalorder %s39, 0
      %s42 = sadd.s32 %s41, 1
      %s43 = scalar_select %p40, %s41, %s42
      %p46 = pneg %p40
      %p47 = scmp.eq.s32.totalorder %s17, 2
      %p48 = por %p46, %p47
      %p49 = scmp.ne.s32.totalorder %s41, %s44
      %p50 = scmp.eq.s32.totalorder %s17, 0
      %p51 = por %p49, %p50
      %p52 = scmp.ne.s32.totalorder %s41, %s44
      %p53 = scmp.eq.s32.totalorder %s22, 2
      %p54 = por %p52, %p53
      %p55 = scmp.ne.s32.totalorder %s44, %s45
      %p56 = scmp.eq.s32.totalorder %s22, 0
      %p57 = por %p55, %p56
      %p58 = scmp.ne.s32.totalorder %s44, %s45
      %p59 = scmp.eq.s32.totalorder %s23, 2
      %p60 = por %p58, %p59
      %p62 = scmp.ne.s32.totalorder %s45, %s61
      %p63 = scmp.eq.s32.totalorder %s23, 0
      %p64 = por %p62, %p63
      %s66 = sadd.s32 %s65, 1
      %p69 = scmp.eq.s32.totalorder %s17, 2
      %p70 = scmp.ne.s32.totalorder %s65, %s67
      %p71 = scmp.eq.s32.totalorder %s17, 0
      %p72 = por %p70, %p71
      %p73 = scmp.ne.s32.totalorder %s65, %s67
      %p74 = scmp.eq.s32.totalorder %s22, 2
      %p75 = por %p73, %p74
      %p76 = scmp.ne.s32.totalorder %s67, %s68
      %p77 = scmp.eq.s32.totalorder %s22, 0
      %p78 = por %p76, %p77
      %p79 = scmp.ne.s32.totalorder %s67, %s68
      %p80 = scmp.eq.s32.totalorder %s23, 2
      %p81 = por %p79, %p80
      %p83 = scmp.ne.s32.totalorder %s68, %s82
      %p84 = scmp.eq.s32.totalorder %s23, 0
      %p85 = por %p83, %p84
      %s87 = sadd.s32 %s86, 1
      %p90 = scmp.eq.s32.totalorder %s17, 2
      %p91 = scmp.ne.s32.totalorder %s86, %s88
      %p92 = scmp.eq.s32.totalorder %s17, 0
      %p93 = por %p91, %p92
      %p94 = scmp.ne.s32.totalorder %s86, %s88
      %p95 = scmp.eq.s32.totalorder %s22, 2
      %p96 = por %p94, %p95
      %p97 = scmp.ne.s32.totalorder %s88, %s89
      %p98 = scmp.eq.s32.totalorder %s22, 0
      %p99 = por %p97, %p98
      %p100 = scmp.ne.s32.totalorder %s88, %s89
      %p101 = scmp.eq.s32.totalorder %s23, 2
      %p102 = por %p100, %p101
      %p104 = scmp.ne.s32.totalorder %s89, %s103
      %p105 = scmp.eq.s32.totalorder %s23, 0
      %p106 = por %p104, %p105
      %s108 = sadd.s32 %s107, 1
      %p111 = scmp.eq.s32.totalorder %s17, 2
      %p112 = scmp.ne.s32.totalorder %s107, %s109
      %p113 = scmp.eq.s32.totalorder %s17, 0
      %p114 = por %p112, %p113
      %p115 = scmp.ne.s32.totalorder %s107, %s109
      %p116 = scmp.eq.s32.totalorder %s22, 2
      %p117 = por %p115, %p116
      %p118 = scmp.ne.s32.totalorder %s109, %s110
      %p119 = scmp.eq.s32.totalorder %s22, 0
      %p120 = por %p118, %p119
      %p121 = scmp.ne.s32.totalorder %s109, %s110
      %p122 = scmp.eq.s32.totalorder %s23, 2
      %p123 = por %p121, %p122
      %p125 = scmp.ne.s32.totalorder %s110, %s124
      %p126 = scmp.eq.s32.totalorder %s23, 0
      %p127 = por %p125, %p126
      %s129 = sadd.s32 %s128, 1
      %p132 = scmp.eq.s32.totalorder %s17, 2
      %p133 = scmp.ne.s32.totalorder %s128, %s130
      %p134 = scmp.eq.s32.totalorder %s17, 0
      %p135 = por %p133, %p134
      %p136 = scmp.ne.s32.totalorder %s128, %s130
      %p137 = scmp.eq.s32.totalorder %s22, 2
      %p138 = por %p136, %p137
      %p139 = scmp.ne.s32.totalorder %s130, %s131
      %p140 = scmp.eq.s32.totalorder %s22, 0
      %p141 = por %p139, %p140
      %p142 = scmp.ne.s32.totalorder %s130, %s131
      %p143 = scmp.eq.s32.totalorder %s23, 2
      %p144 = por %p142, %p143
      %p146 = scmp.ne.s32.totalorder %s131, %s145
      %p147 = scmp.eq.s32.totalorder %s23, 0
      %p148 = por %p146, %p147
      %s150 = sadd.s32 %s149, 1
      %p153 = scmp.eq.s32.totalorder %s17, 2
      %p154 = scmp.ne.s32.totalorder %s149, %s151
      %p155 = scmp.eq.s32.totalorder %s17, 0
      %p156 = por %p154, %p155
      %p157 = scmp.ne.s32.totalorder %s149, %s151
      %p158 = scmp.eq.s32.totalorder %s22, 2
      %p159 = por %p157, %p158
      %p160 = scmp.ne.s32.totalorder %s151, %s152
      %p161 = scmp.eq.s32.totalorder %s22, 0
      %p162 = por %p160, %p161
      %p163 = scmp.ne.s32.totalorder %s151, %s152
      %p164 = scmp.eq.s32.totalorder %s23, 2
      %p165 = por %p163, %p164
      %p167 = scmp.ne.s32.totalorder %s152, %s166
      %p168 = scmp.eq.s32.totalorder %s23, 0
      %p169 = por %p167, %p168
      %s171 = sadd.s32 %s170, 1
      %p174 = scmp.eq.s32.totalorder %s17, 2
      %p175 = scmp.ne.s32.totalorder %s170, %s172
      %p176 = scmp.eq.s32.totalorder %s17, 0
      %p177 = por %p175, %p176
      %p178 = scmp.ne.s32.totalorder %s170, %s172
      %p179 = scmp.eq.s32.totalorder %s22, 2
      %p180 = por %p178, %p179
      %p181 = scmp.ne.s32.totalorder %s172, %s173
      %p182 = scmp.eq.s32.totalorder %s22, 0
      %p183 = por %p181, %p182
      %p184 = scmp.ne.s32.totalorder %s172, %s173
      %p185 = scmp.eq.s32.totalorder %s23, 2
      %p186 = por %p184, %p185
      %p188 = scmp.ne.s32.totalorder %s173, %s187
      %p189 = scmp.eq.s32.totalorder %s23, 0
      %p190 = por %p188, %p189
      %s191 = ssub.s32 %s24, %s36
      %p192 = scmp.eq.s32.totalorder %s191, 0
      %s194 = sadd.s32 %s193, 1
      %s195 = scalar_select %p192, %s193, %s194
      %p198 = pneg %p192
      %p199 = scmp.eq.s32.totalorder %s17, 2
      %p200 = por %p198, %p199
      %p201 = scmp.ne.s32.totalorder %s193, %s196
      %p202 = scmp.eq.s32.totalorder %s17, 0
      %p203 = por %p201, %p202
      %p204 = scmp.ne.s32.totalorder %s193, %s196
      %p205 = scmp.eq.s32.totalorder %s22, 2
      %p206 = por %p204, %p205
      %p207 = scmp.ne.s32.totalorder %s196, %s197
      %p208 = scmp.eq.s32.totalorder %s22, 0
      %p209 = por %p207, %p208
      %p210 = scmp.ne.s32.totalorder %s196, %s197
      %p211 = scmp.eq.s32.totalorder %s23, 2
      %p212 = por %p210, %p211
      %p214 = scmp.ne.s32.totalorder %s197, %s213
      %p215 = scmp.eq.s32.totalorder %s23, 0
      %p216 = por %p214, %p215
      %p217 = scmp.le.s32.totalorder 1, %s17
      %p218 = scmp.lt.s32.totalorder %s17, 4
      %p219 = pnand %p217, %p218
      %p220 = pneg %p219
      // Predicated region
      $region9: #{tpu_custom_call.1} parent=5 // pred_check
        _
      $region10: #{tpu_custom_call.1} parent=5 // pred_check_branch
        %222 = sbr.rel (%p219) target = $region12
      $region11: #{tpu_custom_call.1} parent=5 // pred_region
        %s223 = ssub.s32 %s17, 1
        // Predicated region
        $region13: #{tpu_custom_call.1} parent=11 // pred_check
          %p224 = pneg %p78
        $region14: #{tpu_custom_call.1} parent=11 // pred_check_branch
          %226 = sbr.rel (%p224) target = $region16
        $region15: #{tpu_custom_call.1} parent=11 // pred_region
          _
        $region16: #{tpu_custom_call.1} parent=11 // pred_fallthru
          _
        // Predicated region
        $region17: #{tpu_custom_call.1} parent=11 // pred_check
          %p227 = pneg %p99
        $region18: #{tpu_custom_call.1} parent=11 // pred_check_branch
          %229 = sbr.rel (%p227) target = $region20
        $region19: #{tpu_custom_call.1} parent=11 // pred_region
          _
        $region20: #{tpu_custom_call.1} parent=11 // pred_fallthru
          _
        // Predicated region
        $region21: #{tpu_custom_call.1} parent=11 // pred_check
          %p230 = pneg %p120
        $region22: #{tpu_custom_call.1} parent=11 // pred_check_branch
          %232 = sbr.rel (%p230) target = $region24
        $region23: #{tpu_custom_call.1} parent=11 // pred_region
          _
        $region24: #{tpu_custom_call.1} parent=11 // pred_fallthru
          _
        // Predicated region
        $region25: #{tpu_custom_call.1} parent=11 // pred_check
          %p233 = pneg %p141
        $region26: #{tpu_custom_call.1} parent=11 // pred_check_branch
          %235 = sbr.rel (%p233) target = $region28
        $region27: #{tpu_custom_call.1} parent=11 // pred_region
          _
        $region28: #{tpu_custom_call.1} parent=11 // pred_fallthru
          _
        // Predicated region
        $region29: #{tpu_custom_call.1} parent=11 // pred_check
          %p236 = pneg %p162
        $region30: #{tpu_custom_call.1} parent=11 // pred_check_branch
          %238 = sbr.rel (%p236) target = $region32
        $region31: #{tpu_custom_call.1} parent=11 // pred_region
          _
        $region32: #{tpu_custom_call.1} parent=11 // pred_fallthru
          _
        // Predicated region
        $region33: #{tpu_custom_call.1} parent=11 // pred_check
          %p239 = pneg %p183
        $region34: #{tpu_custom_call.1} parent=11 // pred_check_branch
          %241 = sbr.rel (%p239) target = $region36
        $region35: #{tpu_custom_call.1} parent=11 // pred_region
          _
        $region36: #{tpu_custom_call.1} parent=11 // pred_fallthru
          _
      $region12: #{tpu_custom_call.1} parent=5 // pred_fallthru
        _
      %p242 = scmp.lt.s32.totalorder %s17, 3
      // Predicated region
      $region37: #{tpu_custom_call.1} parent=5 // pred_check
        %p243 = pneg %p242
      $region38: #{tpu_custom_call.1} parent=5 // pred_check_branch
        %245 = sbr.rel (%p243) target = $region40
      $region39: #{tpu_custom_call.1} parent=5 // pred_region
        // Predicated region
        $region41: #{tpu_custom_call.1} parent=39 // pred_check
          %p246 = pneg %p51
        $region42: #{tpu_custom_call.1} parent=39 // pred_check_branch
          %248 = sbr.rel (%p246) target = $region44
        $region43: #{tpu_custom_call.1} parent=39 // pred_region
          %s249 = sand.u32 %s41, 1
          %s250 = scalar_lea.sflag [#allocation4], %s249
          %s251 = sand.u32 %s41, 1
          %s252 = smul.addr %s251, 128
          %s253 = scalar_lea.vmem [#allocation3], %s252
          %s254 = smul.u32 2, %s24
          %s255 = smul.u32 2, %s25
          %s256 = ssub.s32 5, %s255
          %p257 = scmp.lt.s32.totalorder %s256, 2
          %s258 = scalar_select %p257, %s256, 2
          %s259 = smul.u32 64, %s258
          %s260 = ssub.s32 128, %s259
          %s261 = sshll.u32 %s260, 4
          %262 = vsyncadd %s250, %s261
          %p263 = scmp.ne.s32.totalorder 0, %s259
          %s264 = smul.addr %s254, 20
          %s265 = sadd.s32 %s255, %s264
          %s266 = smul.addr %s265, 8
          %s267 = scalar_lea.hbm %s0, %s266
          %s268 = smul.u32 %s258, 8
          %s269 = smul.u32 %s268, 8
          %s270 = sshll.u32 %s267, 4
          %s271 = int_to_ptr.hbm [resolvable:$true] %s270
          %s272 = sshll.u32 %s253, 4
          %s273 = int_to_ptr.vmem [resolvable:$true] %s272
          %s274 = sshll.u32 %s269, 4
          %278 = dma.hbm_to_vmem [thread:$0]  (%p263), %s271, %s274, %s273, %s250, 640, 256, %s268
        $region44: #{tpu_custom_call.1} parent=39 // pred_fallthru
          _
      $region40: #{tpu_custom_call.1} parent=5 // pred_fallthru
        _
      %p279 = scmp.le.s32.totalorder 1, %s17
      %p280 = scmp.lt.s32.totalorder %s17, 4
      %p281 = pnand %p279, %p280
      %p282 = pneg %p281
      // Predicated region
      $region45: #{tpu_custom_call.1} parent=5 // pred_check
        _
      $region46: #{tpu_custom_call.1} parent=5 // pred_check_branch
        %284 = sbr.rel (%p281) target = $region48
      $region47: #{tpu_custom_call.1} parent=5 // pred_region
        %s285 = ssub.s32 %s17, 1
        %s286 = sand.u32 %s44, 1
        %s287 = scalar_lea.sflag [#allocation4], %s286
        %s288 = sand.u32 %s44, 1
        %s289 = smul.addr %s288, 128
        %s290 = scalar_lea.vmem [#allocation3], %s289
        // Predicated region
        $region49: #{tpu_custom_call.1} parent=47 // pred_check
          %p291 = pneg %p57
        $region50: #{tpu_custom_call.1} parent=47 // pred_check_branch
          %293 = sbr.rel (%p291) target = $region52
        $region51: #{tpu_custom_call.1} parent=47 // pred_region
          %295 = dma.done %s287, 2048
        $region52: #{tpu_custom_call.1} parent=47 // pred_fallthru
          _
        %s296 = sand.u32 %s44, 1
        %s297 = scalar_lea.sflag [#allocation4], %s296
        %s298 = sand.u32 %s44, 1
        %s299 = smul.addr %s298, 128
        %s300 = scalar_lea.vmem [#allocation3], %s299
        %p301 = pneg %p57
        %p302 = pneg %p54
        %p303 = pneg %p78
        %p304 = pneg %p75
        %p305 = pneg %p99
        %p306 = pneg %p96
        %p307 = pneg %p120
        %p308 = pneg %p117
        %p309 = pneg %p141
        %p310 = pneg %p138
        %p311 = pneg %p162
        %p312 = pneg %p159
        %p313 = pneg %p183
        %p314 = pneg %p180
        %p315 = pneg %p209
        %p316 = pneg %p206
        %s317 = smul.u32 2, %s26
        %s318 = smul.u32 2, %s27
        %s319 = ssub.s32 5, %s318
        %p320 = scmp.lt.s32.totalorder %s319, 2
        %s321 = scalar_select %p320, %s319, 2
        %s322 = smul.u32 64, %s321
        %p323 = scmp.eq.s32.totalorder %s27, 0
        // Predicated region
        $region53: #{tpu_custom_call.1} parent=47 // pred_check
          %p324 = pneg %p323
        $region54: #{tpu_custom_call.1} parent=47 // pred_check_branch
          %326 = sbr.rel (%p324) target = $region56
        $region55: #{tpu_custom_call.1} parent=47 // pred_region
          %327 = vst [vmem:[#allocation2] sm:$0xff] 0.0
          %328 = vst [vmem:[#allocation2 + $0x8] sm:$0xff] 0.0
          %329 = vst [vmem:[#allocation2 + $0x10] sm:$0xff] 0.0
          %330 = vst [vmem:[#allocation2 + $0x18] sm:$0xff] 0.0
          %331 = vst [vmem:[#allocation2 + $0x20] sm:$0xff] 0.0
          %332 = vst [vmem:[#allocation2 + $0x28] sm:$0xff] 0.0
          %333 = vst [vmem:[#allocation2 + $0x30] sm:$0xff] 0.0
          %334 = vst [vmem:[#allocation2 + $0x38] sm:$0xff] 0.0
        $region56: #{tpu_custom_call.1} parent=47 // pred_fallthru
          _
        %p335 = scmp.lt.s32.totalorder %s27, 2
        // Predicated region
        $region57: #{tpu_custom_call.1} parent=47 // pred_check
          %p336 = pneg %p335
        $region58: #{tpu_custom_call.1} parent=47 // pred_check_branch
          %338 = sbr.rel (%p336) target = $region60
        $region59: #{tpu_custom_call.1} parent=47 // pred_region
          %v339 = vld [vmem:[%s290] sm:$0xff]
          %v340 = vld [vmem:[%s290 + $0x10] sm:$0xff]
          %v341 = vld [vmem:[%s290 + $0x20] sm:$0xff]
          %v342 = vld [vmem:[%s290 + $0x30] sm:$0xff]
          %v343 = vld [vmem:[%s290 + $0x40] sm:$0xff]
          %v344 = vld [vmem:[%s290 + $0x50] sm:$0xff]
          %v345 = vld [vmem:[%s290 + $0x60] sm:$0xff]
          %v346 = vld [vmem:[%s290 + $0x70] sm:$0xff]
          %v347 = vld [vmem:[%s290 + $0x8] sm:$0xff]
          %v348 = vld [vmem:[%s290 + $0x18] sm:$0xff]
          %v349 = vld [vmem:[%s290 + $0x28] sm:$0xff]
          %v350 = vld [vmem:[%s290 + $0x38] sm:$0xff]
          %v351 = vld [vmem:[%s290 + $0x48] sm:$0xff]
          %v352 = vld [vmem:[%s290 + $0x58] sm:$0xff]
          %v353 = vld [vmem:[%s290 + $0x68] sm:$0xff]
          %v354 = vld [vmem:[%s290 + $0x78] sm:$0xff]
          %v355 = vadd.f32 %v339, %v347
          %v356 = vadd.f32 %v340, %v348
          %v357 = vadd.f32 %v341, %v349
          %v358 = vadd.f32 %v342, %v350
          %v359 = vadd.f32 %v343, %v351
          %v360 = vadd.f32 %v344, %v352
          %v361 = vadd.f32 %v345, %v353
          %v362 = vadd.f32 %v346, %v354
          %v363 = vld [vmem:[#allocation2] sm:$0xff]
          %v364 = vld [vmem:[#allocation2 + $0x8] sm:$0xff]
          %v365 = vld [vmem:[#allocation2 + $0x10] sm:$0xff]
          %v366 = vld [vmem:[#allocation2 + $0x18] sm:$0xff]
          %v367 = vld [vmem:[#allocation2 + $0x20] sm:$0xff]
          %v368 = vld [vmem:[#allocation2 + $0x28] sm:$0xff]
          %v369 = vld [vmem:[#allocation2 + $0x30] sm:$0xff]
          %v370 = vld [vmem:[#allocation2 + $0x38] sm:$0xff]
          %v371 = vadd.f32 %v363, %v355
          %v372 = vadd.f32 %v364, %v356
          %v373 = vadd.f32 %v365, %v357
          %v374 = vadd.f32 %v366, %v358
          %v375 = vadd.f32 %v367, %v359
          %v376 = vadd.f32 %v368, %v360
          %v377 = vadd.f32 %v369, %v361
          %v378 = vadd.f32 %v370, %v362
          %379 = vst [vmem:[#allocation2] sm:$0xff] %v371
          %380 = vst [vmem:[#allocation2 + $0x8] sm:$0xff] %v372
          %381 = vst [vmem:[#allocation2 + $0x10] sm:$0xff] %v373
          %382 = vst [vmem:[#allocation2 + $0x18] sm:$0xff] %v374
          %383 = vst [vmem:[#allocation2 + $0x20] sm:$0xff] %v375
          %384 = vst [vmem:[#allocation2 + $0x28] sm:$0xff] %v376
          %385 = vst [vmem:[#allocation2 + $0x30] sm:$0xff] %v377
          %386 = vst [vmem:[#allocation2 + $0x38] sm:$0xff] %v378
        $region60: #{tpu_custom_call.1} parent=47 // pred_fallthru
          _
        %p387 = scmp.eq.s32.totalorder %s27, 2
        // Predicated region
        $region61: #{tpu_custom_call.1} parent=47 // pred_check
          %p388 = pneg %p387
        $region62: #{tpu_custom_call.1} parent=47 // pred_check_branch
          %390 = sbr.rel (%p388) target = $region64
        $region63: #{tpu_custom_call.1} parent=47 // pred_region
          %v391 = vld [vmem:[%s290] sm:$0xff]
          %v392 = vld [vmem:[%s290 + $0x10] sm:$0xff]
          %v393 = vld [vmem:[%s290 + $0x20] sm:$0xff]
          %v394 = vld [vmem:[%s290 + $0x30] sm:$0xff]
          %v395 = vld [vmem:[%s290 + $0x40] sm:$0xff]
          %v396 = vld [vmem:[%s290 + $0x50] sm:$0xff]
          %v397 = vld [vmem:[%s290 + $0x60] sm:$0xff]
          %v398 = vld [vmem:[%s290 + $0x70] sm:$0xff]
          %v399 = vlaneseq
          %v400 = vand.u32 %v399, 127
          %v401 = vadd.s32 %v400, 512
          %vm402 = vcmp.lt.s32.totalorder %v401, 600
          %v403 = vsel %vm402, 1, 0
          %vm404 = vcmp.eq.s32.totalorder %v403, 1
          %v405 = vsel %vm404, %v391, 0.0
          %v406 = vsel %vm404, %v392, 0.0
          %v407 = vsel %vm404, %v393, 0.0
          %v408 = vsel %vm404, %v394, 0.0
          %v409 = vsel %vm404, %v395, 0.0
          %v410 = vsel %vm404, %v396, 0.0
          %v411 = vsel %vm404, %v397, 0.0
          %v412 = vsel %vm404, %v398, 0.0
          %v413 = vld [vmem:[#allocation2] sm:$0xff]
          %v414 = vld [vmem:[#allocation2 + $0x8] sm:$0xff]
          %v415 = vld [vmem:[#allocation2 + $0x10] sm:$0xff]
          %v416 = vld [vmem:[#allocation2 + $0x18] sm:$0xff]
          %v417 = vld [vmem:[#allocation2 + $0x20] sm:$0xff]
          %v418 = vld [vmem:[#allocation2 + $0x28] sm:$0xff]
          %v419 = vld [vmem:[#allocation2 + $0x30] sm:$0xff]
          %v420 = vld [vmem:[#allocation2 + $0x38] sm:$0xff]
          %v421 = vadd.f32 %v413, %v405
          %v422 = vadd.f32 %v414, %v406
          %v423 = vadd.f32 %v415, %v407
          %v424 = vadd.f32 %v416, %v408
          %v425 = vadd.f32 %v417, %v409
          %v426 = vadd.f32 %v418, %v410
          %v427 = vadd.f32 %v419, %v411
          %v428 = vadd.f32 %v420, %v412
          %429 = vst [vmem:[#allocation2] sm:$0xff] %v421
          %430 = vst [vmem:[#allocation2 + $0x8] sm:$0xff] %v422
          %431 = vst [vmem:[#allocation2 + $0x10] sm:$0xff] %v423
          %432 = vst [vmem:[#allocation2 + $0x18] sm:$0xff] %v424
          %433 = vst [vmem:[#allocation2 + $0x20] sm:$0xff] %v425
          %434 = vst [vmem:[#allocation2 + $0x28] sm:$0xff] %v426
          %435 = vst [vmem:[#allocation2 + $0x30] sm:$0xff] %v427
          %436 = vst [vmem:[#allocation2 + $0x38] sm:$0xff] %v428
          %v437 = vld [vmem:[#allocation2] sm:$0xff]
          %v438 = vld [vmem:[#allocation2 + $0x8] sm:$0xff]
          %v439 = vld [vmem:[#allocation2 + $0x10] sm:$0xff]
          %v440 = vld [vmem:[#allocation2 + $0x18] sm:$0xff]
          %v441 = vld [vmem:[#allocation2 + $0x20] sm:$0xff]
          %v442 = vld [vmem:[#allocation2 + $0x28] sm:$0xff]
          %v443 = vld [vmem:[#allocation2 + $0x30] sm:$0xff]
          %v444 = vld [vmem:[#allocation2 + $0x38] sm:$0xff]
          %445 = vadd.xlane.f32.xlu0 %v437
          %v446 = vpop.xlane.xlu0 %445
          %447 = vadd.xlane.f32.xlu0 %v438
          %v448 = vpop.xlane.xlu0 %447
          %449 = vadd.xlane.f32.xlu0 %v439
          %v450 = vpop.xlane.xlu0 %449
          %451 = vadd.xlane.f32.xlu0 %v440
          %v452 = vpop.xlane.xlu0 %451
          %453 = vadd.xlane.f32.xlu0 %v441
          %v454 = vpop.xlane.xlu0 %453
          %455 = vadd.xlane.f32.xlu0 %v442
          %v456 = vpop.xlane.xlu0 %455
          %457 = vadd.xlane.f32.xlu0 %v443
          %v458 = vpop.xlane.xlu0 %457
          %459 = vadd.xlane.f32.xlu0 %v444
          %v460 = vpop.xlane.xlu0 %459
          %v461 = vmul.f32 %v446, 0.0016666667
          %v462 = vmul.f32 %v448, 0.0016666667
          %v463 = vmul.f32 %v450, 0.0016666667
          %v464 = vmul.f32 %v452, 0.0016666667
          %v465 = vmul.f32 %v454, 0.0016666667
          %v466 = vmul.f32 %v456, 0.0016666667
          %v467 = vmul.f32 %v458, 0.0016666667
          %v468 = vmul.f32 %v460, 0.0016666667
          %v469 = vld [vmem:[%s1] sm:$0xff]
          %v470 = vld [vmem:[%s1 + $0x8] sm:$0xff]
          %v471 = vld [vmem:[%s1 + $0x10] sm:$0xff]
          %v472 = vld [vmem:[%s1 + $0x18] sm:$0xff]
          %v473 = vld [vmem:[%s2] sm:$0x1]
          %v475 = vperm.slane %v473, 0
          %v485 = vperm.slane %v461, %v400
          %v486 = vadd.s32 %v400, 4294967288
          %v487 = vperm.slane %v462, %v486
          %vm488 = vcmask 130112
          %v489 = vsel %vm488, %v487, %v485
          %v490 = vadd.s32 %v400, 4294967280
          %v491 = vperm.slane %v463, %v490
          %vm492 = vcmask 195712
          %v493 = vsel %vm492, %v491, %v489
          %v494 = vadd.s32 %v400, 4294967272
          %v495 = vperm.slane %v464, %v494
          %vm496 = vcmask 261312
          %v497 = vsel %vm496, %v495, %v493
          %v498 = vperm.slane %v465, %v400
          %v499 = vperm.slane %v466, %v486
          %v500 = vsel %vm488, %v499, %v498
          %v501 = vperm.slane %v467, %v490
          %v502 = vsel %vm492, %v501, %v500
          %v503 = vperm.slane %v468, %v494
          %v504 = vsel %vm496, %v503, %v502
          %vm505 = vcmask 1041409
          %v506 = vsel %vm505, %v504, %v497
          %vm507 = vcmask 261120
          %v508 = vsel %vm507, %v506, 0
          %510 = vmatpush.msra.mxu0 0.0
          %511 = vmatpush.msra.mxu0 0.0
          %512 = vmatpush.msra.mxu0 0.0
          %513 = vmatpush.msra.mxu0 0.0
          %514 = vmatpush.msra.mxu0 0.0
          %515 = vmatpush.msra.mxu0 0.0
          %516 = vmatpush.msra.mxu0 0.0
          %517 = vmatpush.msra.mxu0 0.0
          %518 = vmatpush.msra.mxu0 0.0
          %519 = vmatpush.msra.mxu0 0.0
          %520 = vmatpush.msra.mxu0 0.0
          %521 = vmatpush.msra.mxu0 0.0
          %522 = vmatpush.msra.mxu0 %v472
          %523 = vmatpush.msra.mxu0 %v471
          %524 = vmatpush.msra.mxu0 %v470
          %525 = vmatpush.msra.mxu0 %v469
          %526 = vmatmul.f32.gmra.mxu0 %v508
          %v527 = vpop.f32.mrf.mxu0
          %v528 = vadd.f32 %v475, %v527
          %529 = vdwg.mxu0
          %v530 = vmax.f32 %v528, 0.0
          %v531 = vld [vmem:[%s3] sm:$0xff]
          %v532 = vld [vmem:[%s3 + $0x8] sm:$0xff]
          %v533 = vld [vmem:[%s3 + $0x10] sm:$0xff]
          %v534 = vld [vmem:[%s3 + $0x18] sm:$0xff]
          %v535 = vld [vmem:[%s3 + $0x20] sm:$0xff]
          %v536 = vld [vmem:[%s3 + $0x28] sm:$0xff]
          %v537 = vld [vmem:[%s3 + $0x30] sm:$0xff]
          %v538 = vld [vmem:[%s3 + $0x38] sm:$0xff]
          %v539 = vld [vmem:[%s3 + $0x40] sm:$0xff]
          %v540 = vld [vmem:[%s3 + $0x48] sm:$0xff]
          %v541 = vld [vmem:[%s3 + $0x50] sm:$0xff]
          %v542 = vld [vmem:[%s3 + $0x58] sm:$0xff]
          %v543 = vld [vmem:[%s3 + $0x60] sm:$0xff]
          %v544 = vld [vmem:[%s3 + $0x68] sm:$0xff]
          %v545 = vld [vmem:[%s3 + $0x70] sm:$0xff]
          %v546 = vld [vmem:[%s3 + $0x78] sm:$0xff]
          %v547 = vld [vmem:[%s4] sm:$0x1]
          %v549 = vperm.slane %v547, 0
          %551 = vmatpush.msra.mxu0 %v546
          %552 = vmatpush.msra.mxu0 %v545
          %553 = vmatpush.msra.mxu0 %v544
          %554 = vmatpush.msra.mxu0 %v543
          %555 = vmatpush.msra.mxu0 %v542
          %556 = vmatpush.msra.mxu0 %v541
          %557 = vmatpush.msra.mxu0 %v540
          %558 = vmatpush.msra.mxu0 %v539
          %559 = vmatpush.msra.mxu0 %v538
          %560 = vmatpush.msra.mxu0 %v537
          %561 = vmatpush.msra.mxu0 %v536
          %562 = vmatpush.msra.mxu0 %v535
          %563 = vmatpush.msra.mxu0 %v534
          %564 = vmatpush.msra.mxu0 %v533
          %565 = vmatpush.msra.mxu0 %v532
          %566 = vmatpush.msra.mxu0 %v531
          %567 = vmatmul.f32.gmra.mxu0 %v530
          %v568 = vpop.f32.mrf.mxu0
          %v569 = vadd.f32 %v549, %v568
          %570 = vdwg.mxu0
          %v571 = vmax.f32 %v569, 0.0
          %v572 = vld [vmem:[%s5] sm:$0xff]
          %v573 = vld [vmem:[%s5 + $0x8] sm:$0xff]
          %v574 = vld [vmem:[%s5 + $0x10] sm:$0xff]
          %v575 = vld [vmem:[%s5 + $0x18] sm:$0xff]
          %v576 = vld [vmem:[%s6] sm:$0x1]
          %v578 = vperm.slane %v576, 0
          %v581 = vsel %vm507, %v571, 0
          %583 = vmatpush.msra.mxu0 0.0
          %584 = vmatpush.msra.mxu0 0.0
          %585 = vmatpush.msra.mxu0 0.0
          %586 = vmatpush.msra.mxu0 0.0
          %587 = vmatpush.msra.mxu0 0.0
          %588 = vmatpush.msra.mxu0 0.0
          %589 = vmatpush.msra.mxu0 0.0
          %590 = vmatpush.msra.mxu0 0.0
          %591 = vmatpush.msra.mxu0 0.0
          %592 = vmatpush.msra.mxu0 0.0
          %593 = vmatpush.msra.mxu0 0.0
          %594 = vmatpush.msra.mxu0 0.0
          %595 = vmatpush.msra.mxu0 %v575
          %596 = vmatpush.msra.mxu0 %v574
          %597 = vmatpush.msra.mxu0 %v573
          %598 = vmatpush.msra.mxu0 %v572
          %599 = vmatmul.f32.gmra.mxu0 %v581
          %v600 = vpop.f32.mrf.mxu0
          %v601 = vadd.f32 %v578, %v600
          %602 = vdwg.mxu0
          %vm603 = vcmask 33792
          %604 = vst.msk [vmem:[#allocation6] sm:$0x3] %vm603, %v601
        $region64: #{tpu_custom_call.1} parent=47 // pred_fallthru
          _
        // Predicated region
        $region65: #{tpu_custom_call.1} parent=47 // pred_check
          %p605 = pneg %p206
        $region66: #{tpu_custom_call.1} parent=47 // pred_check_branch
          %607 = sbr.rel (%p605) target = $region68
        $region67: #{tpu_custom_call.1} parent=47 // pred_region
          %609 = vsyncadd [#allocation5], 0
          %s610 = smul.addr %s26, 2
          %s611 = scalar_lea.hbm %s7, %s610
          %s613 = sshll.u32 [#allocation6], 4
          %s614 = int_to_ptr.vmem [resolvable:$true] %s613
          %s615 = sshll.u32 %s611, 4
          %s616 = int_to_ptr.hbm [resolvable:$true] %s615
          %618 = dma.vmem_to_hbm [thread:$0]  %s614, 32, %s616, [#allocation5]
        $region68: #{tpu_custom_call.1} parent=47 // pred_fallthru
          _
        // Predicated region
        $region69: #{tpu_custom_call.1} parent=47 // pred_check
          %p619 = pneg %p206
        $region70: #{tpu_custom_call.1} parent=47 // pred_check_branch
          %621 = sbr.rel (%p619) target = $region72
        $region71: #{tpu_custom_call.1} parent=47 // pred_region
          %623 = dma.done [#allocation5], 32
        $region72: #{tpu_custom_call.1} parent=47 // pred_fallthru
          _
      $region48: #{tpu_custom_call.1} parent=5 // pred_fallthru
        _
      %p624 = scmp.le.s32.totalorder 2, %s17
      // Predicated region
      $region73: #{tpu_custom_call.1} parent=5 // pred_check
        %p625 = pneg %p624
      $region74: #{tpu_custom_call.1} parent=5 // pred_check_branch
        %627 = sbr.rel (%p625) target = $region76
      $region75: #{tpu_custom_call.1} parent=5 // pred_region
        %s628 = ssub.s32 %s17, 2
      $region76: #{tpu_custom_call.1} parent=5 // pred_fallthru
        _
    $region6: #{tpu_custom_call.1} parent=1 // loop_footer
      %s21 = sadd.s32 1, %s17
    $region7: #{tpu_custom_call.1} parent=1 // loop_footer_branch
      %16 = sbr.rel target = $region3
    $region8: #{tpu_custom_call.1} parent=1 // loop_exit
      _
    %629 = vsyncpa [#allocation4], 1
    %s630 = scalar_lea.sflag [#allocation4], 1
    %631 = vsyncpa %s630, 1
    %632 = vsyncpa [#allocation5], 1
    %s633 = scalar_lea.sflag [#allocation5], 1
    %634 = vsyncpa %s633, 1

</llo_original>
